<compile_context>
chip_gen: v5e
topology: v5e:2x2
jax: 0.10.0
libtpu: 0.0.40
codegen_flags: <defaults>
</compile_context>

<pallas_src>
import functools

import jax
import jax.numpy as jnp
from jax.experimental import pallas as pl
from jax.experimental.pallas import tpu as pltpu


_MAX_CHUNK_C = 2048  # lanes per class chunk (multiple of 128)


def _round_up(x, m):
    return ((x + m - 1) // m) * m


def _vmem_budget_bytes():
    """Generation-aware per-kernel working-set budget (bytes)."""
    try:
        cap = int(getattr(pltpu.get_tpu_info(), "vmem_capacity_bytes", 0) or 0)
    except Exception:  # non-TPU tracing / older jax: fall back conservatively
        cap = 0
    if cap > 0:
        # ~1/4 of physical VMEM: ~32 MiB on v5e/v6e (128 MiB), ~16 MiB on v7x
        # (64 MiB per TensorCore with two cores sharing the chip).
        return max(8 << 20, min(cap // 4, 48 << 20))
    return 16 << 20  # safe even against v5e's 16 MiB scoped-VMEM default


def _choose_tile_n(n, chunk_c, in_itemsize, vmem_budget, max_tile_n=2048):
    """Largest multiple-of-16 row tile whose REAL resident footprint fits.

    Per row of a batch tile:
      2 * chunk_c * in_itemsize   double-buffered input logits chunk
      ~4 * chunk_c * 4            f32 exp/sub temps + int32 column iota/one-hot
    plus a few (., 1) accumulators and the targets column (negligible).
    """
    per_row = chunk_c * (2 * in_itemsize + 16) + 64
    tile = (vmem_budget // per_row) // 16 * 16
    tile = max(16, min(tile, max_tile_n, _round_up(n, 16)))
    # v7x has two TensorCores: prefer >= 2 row tiles so the "parallel" batch
    # axis can shard across them (neutral on single-TC v5e / v6e).
    if n > 16 and pl.cdiv(n, tile) < 2:
        tile = _round_up(pl.cdiv(n, 2), 16)
    return tile


def _cls_loss_kernel(logits_ref, tgt_ref, partial_ref, m_acc, s_acc, t_acc,
                     *, n_valid, num_classes):
    """Grid = (row tiles [parallel], class chunks [arbitrary]).

    Online logsumexp over class chunks; the per-row-tile partial sum of the
    cross-entropy is written on the last class chunk.
    """
    i = pl.program_id(0)                       # batch (row) tile index
    j = pl.program_id(1)                       # class chunk index
    tile_n, chunk_c = logits_ref.shape
    ragged_c = (num_classes % chunk_c) != 0    # static at trace time

    @pl.when(j == 0)
    def _():
        m_acc[...] = jnp.full(m_acc.shape, -jnp.inf, m_acc.dtype)
        s_acc[...] = jnp.zeros(s_acc.shape, s_acc.dtype)
        t_acc[...] = jnp.zeros(t_acc.shape, t_acc.dtype)

    x = logits_ref[...]                        # (tile_n, chunk_c), input dtype
    tgt = tgt_ref[...]                         # (tile_n, 1) int32

    col = j * chunk_c + jax.lax.broadcasted_iota(jnp.int32, (tile_n, chunk_c), 1)
    col_ok = (col < num_classes) if ragged_c else None

    # ---- online max: exact in the input dtype, only (tile_n,1) is upcast ----
    if ragged_c:
        neg_cap = jnp.asarray(jnp.finfo(x.dtype).min, x.dtype)
        x_for_max = jnp.where(col_ok, x, neg_cap)
    else:
        x_for_max = x
    m_prev = m_acc[...]
    m_new = jnp.maximum(
        m_prev, jnp.max(x_for_max, axis=-1, keepdims=True).astype(jnp.float32))

    # ---- exp / sum path in f32, bounded to one class chunk ----
    p = jnp.exp(x.astype(jnp.float32) - m_new)
    if ragged_c:
        p = jnp.where(col_ok, p, 0.0)          # select: drops OOB-column inf/NaN
    s_acc[...] = s_acc[...] * jnp.exp(m_prev - m_new) + jnp.sum(
        p, axis=-1, keepdims=True)
    m_acc[...] = m_new

    # ---- gather logits[r, tgt[r]] via one-hot select in the input dtype ----
    hit = col == tgt
    t_acc[...] += jnp.sum(jnp.where(hit, x, jnp.zeros((), x.dtype)),
                          axis=-1, keepdims=True).astype(jnp.float32)

    @pl.when(j == pl.num_programs(1) - 1)
    def _():
        per_sample = m_acc[...] + jnp.log(s_acc[...]) - t_acc[...]
        # ragged last row tile: rows past the true N contribute exactly 0
        row = i * tile_n + jax.lax.broadcasted_iota(jnp.int32, (tile_n, 1), 0)
        per_sample = jnp.where(row < n_valid, per_sample, 0.0)
        partial_ref[...] = jnp.sum(per_sample).reshape(1, 1, 1)


@functools.partial(jax.jit, static_argnames=("tile_n", "chunk_c"))
def cls_loss(logits, targets, *, tile_n=None, chunk_c=None):
    """CrossEntropyLoss (mean) over (N, C) logits and (N,) integer targets."""
    n, c = logits.shape
    in_itemsize = jnp.dtype(logits.dtype).itemsize

    # ---- class chunk (lane) sizing ----
    if chunk_c is None:
        chunk_c = min(c, _MAX_CHUNK_C)
    if chunk_c != c:
        chunk_c = max(128, (min(chunk_c, c) // 128) * 128)  # lane-aligned chunks
        if chunk_c >= c:
            chunk_c = c
    num_chunks = pl.cdiv(c, chunk_c)

    # ---- batch tile (row) sizing ----
    budget = _vmem_budget_bytes()
    if tile_n is None:
        tile_n = _choose_tile_n(n, chunk_c, in_itemsize, budget)
    tile_n = max(16, min(_round_up(tile_n, 16), _round_up(n, 16)))
    num_row_tiles = pl.cdiv(n, tile_n)

    tgt2d = targets.astype(jnp.int32).reshape(n, 1)

    kernel = functools.partial(_cls_loss_kernel, n_valid=n, num_classes=c)

    partials = pl.pallas_call(
        kernel,
        out_shape=jax.ShapeDtypeStruct((num_row_tiles, 1, 1), jnp.float32),
        grid_spec=pltpu.PrefetchScalarGridSpec(
            num_scalar_prefetch=0,
            grid=(num_row_tiles, num_chunks),
            in_specs=[
                pl.BlockSpec((tile_n, chunk_c), lambda i, j: (i, j)),  # logits
                pl.BlockSpec((tile_n, 1), lambda i, j: (i, 0)),        # targets
            ],
            out_specs=pl.BlockSpec((1, 1, 1), lambda i, j: (i, 0, 0)),
            scratch_shapes=[pltpu.VMEM((tile_n, 1), jnp.float32)] * 3,  # m, s, t
        ),
        compiler_params=pltpu.CompilerParams(
            dimension_semantics=("parallel", "arbitrary"),
            vmem_limit_bytes=int(min(2 * budget, 64 * 1024 * 1024)),
        ),
    )(logits, tgt2d)

    # divide by the *global* N exactly once
    return jnp.sum(partials) / jnp.float32(n)


if __name__ == "__main__":
    key = jax.random.PRNGKey(0)
    k_logits, k_tgt = jax.random.split(key)

    N, C = 80, 384  # small batch of 80 samples, 384 classes
    logits = jax.random.normal(k_logits, (N, C), dtype=jnp.float32)
    targets = jax.random.randint(k_tgt, (N,), 0, C, dtype=jnp.int32)

    # reference = same math as torch nn.CrossEntropyLoss (mean reduction)
    ref = jnp.mean(
        jax.nn.logsumexp(logits, axis=-1)
        - jnp.take_along_axis(logits, targets[:, None], axis=-1)[:, 0])

    # 1) ragged last row tile (80 -> 3 tiles of 32), single class chunk
    loss = cls_loss(logits, targets, tile_n=32)
    jax.block_until_ready(loss)
    assert jnp.allclose(loss, ref, rtol=1e-5, atol=1e-5), (loss, ref)

    # 2) class-chunked online logsumexp with a ragged last class chunk
    #    (384 classes -> chunks of 256; second chunk half-masked)
    loss_chunked = cls_loss(logits, targets, chunk_c=256)
    jax.block_until_ready(loss_chunked)
    assert jnp.allclose(loss_chunked, ref, rtol=1e-5, atol=1e-5), (loss_chunked, ref)

    # 3) bf16-on-the-wire, fully auto-tiled path (halved HBM traffic);
    #    loose tolerance for bf16 rounding
    loss_bf16 = cls_loss(logits.astype(jnp.bfloat16), targets)
    jax.block_until_ready(loss_bf16)
    assert jnp.allclose(loss_bf16, ref, rtol=3e-2, atol=3e-2), (loss_bf16, ref)

    print("KERNEL_OK")
</pallas_src>

<mosaic_0001>
module attributes {stable_mosaic.version = 11 : i64} {
  func.func @_cls_loss_kernel(%arg0: i32, %arg1: i32, %arg2: memref<32x384xf32, #tpu.memory_space<vmem>>, %arg3: memref<32x1xi32, #tpu.memory_space<vmem>>, %arg4: memref<1x1x1xf32, #tpu.memory_space<vmem>>, %arg5: memref<32x1xf32, #tpu.memory_space<vmem>>, %arg6: memref<32x1xf32, #tpu.memory_space<vmem>>, %arg7: memref<32x1xf32, #tpu.memory_space<vmem>>) attributes {dimension_semantics = [#tpu.dimension_semantics<parallel>, #tpu.dimension_semantics<arbitrary>], iteration_bounds = array<i64: 3, 1>, scalar_prefetch = 0 : i64, scratch_operands = 3 : i64, tpu.core_type = #tpu.core_type<tc>, window_params = [{transform_indices = @transform_0, window_bounds = array<i64: 32, 384>}, {transform_indices = @transform_1, window_bounds = array<i64: 32, 1>}, {transform_indices = @transform_2, window_bounds = array<i64: 1, 1, 1>}]} {
    %c0_i32 = arith.constant 0 : i32
    %0 = arith.cmpi eq, %arg1, %c0_i32 : i32
    %1 = arith.extui %0 : i1 to i32
    %c0_i32_0 = arith.constant 0 : i32
    %2 = arith.cmpi ne, %1, %c0_i32_0 : i32
    scf.if %2 {
      %cst_21 = arith.constant 0xFF800000 : f32
      %37 = vector.broadcast %cst_21 : f32 to vector<32x1xf32>
      %c0_22 = arith.constant 0 : index
      %c0_23 = arith.constant 0 : index
      %38 = vector.load %arg5[%c0_22, %c0_23] : memref<32x1xf32, #tpu.memory_space<vmem>>, vector<32x1xf32>
      tpu.vector_store %arg5[%c0_22, %c0_23], %37 {strides = array<i32>} : memref<32x1xf32, #tpu.memory_space<vmem>>, vector<32x1xf32>,
      %cst_24 = arith.constant 0.000000e+00 : f32
      %39 = vector.broadcast %cst_24 : f32 to vector<32x1xf32>
      %c0_25 = arith.constant 0 : index
      %c0_26 = arith.constant 0 : index
      %40 = vector.load %arg6[%c0_25, %c0_26] : memref<32x1xf32, #tpu.memory_space<vmem>>, vector<32x1xf32>
      tpu.vector_store %arg6[%c0_25, %c0_26], %39 {strides = array<i32>} : memref<32x1xf32, #tpu.memory_space<vmem>>, vector<32x1xf32>,
      %cst_27 = arith.constant 0.000000e+00 : f32
      %41 = vector.broadcast %cst_27 : f32 to vector<32x1xf32>
      %c0_28 = arith.constant 0 : index
      %c0_29 = arith.constant 0 : index
      %42 = vector.load %arg7[%c0_28, %c0_29] : memref<32x1xf32, #tpu.memory_space<vmem>>, vector<32x1xf32>
      tpu.vector_store %arg7[%c0_28, %c0_29], %41 {strides = array<i32>} : memref<32x1xf32, #tpu.memory_space<vmem>>, vector<32x1xf32>,
    } else {
    }
    %c0 = arith.constant 0 : index
    %c0_1 = arith.constant 0 : index
    %3 = vector.load %arg2[%c0, %c0_1] : memref<32x384xf32, #tpu.memory_space<vmem>>, vector<32x384xf32>
    %c0_2 = arith.constant 0 : index
    %c0_3 = arith.constant 0 : index
    %4 = vector.load %arg3[%c0_2, %c0_3] : memref<32x1xi32, #tpu.memory_space<vmem>>, vector<32x1xi32>
    %c384_i32 = arith.constant 384 : i32
    %5 = arith.muli %arg1, %c384_i32 : i32
    %6 = tpu.iota {dimensions = array<i32: 1>} : vector<32x384xi32>
    %7 = vector.broadcast %5 : i32 to vector<32x384xi32>
    %8 = arith.addi %7, %6 : vector<32x384xi32>
    %c0_4 = arith.constant 0 : index
    %c0_5 = arith.constant 0 : index
    %9 = vector.load %arg5[%c0_4, %c0_5] : memref<32x1xf32, #tpu.memory_space<vmem>>, vector<32x1xf32>
    %cst = arith.constant dense<0xFF800000> : vector<32xf32>
    %10 = vector.multi_reduction <maximumf>, %3, %cst [1] : vector<32x384xf32> to vector<32xf32>
    %11 = vector.shape_cast %10 : vector<32xf32> to vector<32x1xf32>
    %12 = arith.maximumf %9, %11 : vector<32x1xf32>
    %13 = vector.broadcast %12 : vector<32x1xf32> to vector<32x384xf32>
    %14 = arith.subf %3, %13 : vector<32x384xf32>
    %15 = math.exp %14 : vector<32x384xf32>
    %c0_6 = arith.constant 0 : index
    %c0_7 = arith.constant 0 : index
    %16 = vector.load %arg6[%c0_6, %c0_7] : memref<32x1xf32, #tpu.memory_space<vmem>>, vector<32x1xf32>
    %17 = arith.subf %9, %12 : vector<32x1xf32>
    %18 = math.exp %17 : vector<32x1xf32>
    %19 = arith.mulf %16, %18 : vector<32x1xf32>
    %cst_8 = arith.constant dense<0.000000e+00> : vector<32xf32>
    %20 = vector.multi_reduction <add>, %15, %cst_8 [1] : vector<32x384xf32> to vector<32xf32>
    %21 = vector.shape_cast %20 : vector<32xf32> to vector<32x1xf32>
    %22 = arith.addf %19, %21 : vector<32x1xf32>
    %c0_9 = arith.constant 0 : index
    %c0_10 = arith.constant 0 : index
    %23 = vector.load %arg6[%c0_9, %c0_10] : memref<32x1xf32, #tpu.memory_space<vmem>>, vector<32x1xf32>
    tpu.vector_store %arg6[%c0_9, %c0_10], %22 {strides = array<i32>} : memref<32x1xf32, #tpu.memory_space<vmem>>, vector<32x1xf32>,
    %c0_11 = arith.constant 0 : index
    %c0_12 = arith.constant 0 : index
    %24 = vector.load %arg5[%c0_11, %c0_12] : memref<32x1xf32, #tpu.memory_space<vmem>>, vector<32x1xf32>
    tpu.vector_store %arg5[%c0_11, %c0_12], %12 {strides = array<i32>} : memref<32x1xf32, #tpu.memory_space<vmem>>, vector<32x1xf32>,
    %25 = vector.broadcast %4 : vector<32x1xi32> to vector<32x384xi32>
    %26 = arith.cmpi eq, %8, %25 : vector<32x384xi32>
    %c0_13 = arith.constant 0 : index
    %c0_14 = arith.constant 0 : index
    %27 = vector.load %arg7[%c0_13, %c0_14] : memref<32x1xf32, #tpu.memory_space<vmem>>, vector<32x1xf32>
    %cst_15 = arith.constant 0.000000e+00 : f32
    %28 = vector.broadcast %cst_15 : f32 to vector<32x384xf32>
    %29 = arith.select %26, %3, %28 : vector<32x384xi1>, vector<32x384xf32>
    %cst_16 = arith.constant dense<0.000000e+00> : vector<32xf32>
    %30 = vector.multi_reduction <add>, %29, %cst_16 [1] : vector<32x384xf32> to vector<32xf32>
    %31 = vector.shape_cast %30 : vector<32xf32> to vector<32x1xf32>
    %32 = arith.addf %27, %31 : vector<32x1xf32>
    %c0_17 = arith.constant 0 : index
    %c0_18 = arith.constant 0 : index
    %33 = vector.load %arg7[%c0_17, %c0_18] : memref<32x1xf32, #tpu.memory_space<vmem>>, vector<32x1xf32>
    tpu.vector_store %arg7[%c0_17, %c0_18], %32 {strides = array<i32>} : memref<32x1xf32, #tpu.memory_space<vmem>>, vector<32x1xf32>,
    %c0_i32_19 = arith.constant 0 : i32
    %34 = arith.cmpi eq, %arg1, %c0_i32_19 : i32
    %35 = arith.extui %34 : i1 to i32
    %c0_i32_20 = arith.constant 0 : i32
    %36 = arith.cmpi ne, %35, %c0_i32_20 : i32
    scf.if %36 {
      %c0_21 = arith.constant 0 : index
      %c0_22 = arith.constant 0 : index
      %37 = vector.load %arg5[%c0_21, %c0_22] : memref<32x1xf32, #tpu.memory_space<vmem>>, vector<32x1xf32>
      %c0_23 = arith.constant 0 : index
      %c0_24 = arith.constant 0 : index
      %38 = vector.load %arg6[%c0_23, %c0_24] : memref<32x1xf32, #tpu.memory_space<vmem>>, vector<32x1xf32>
      %39 = math.log %38 : vector<32x1xf32>
      %40 = arith.addf %37, %39 : vector<32x1xf32>
      %c0_25 = arith.constant 0 : index
      %c0_26 = arith.constant 0 : index
      %41 = vector.load %arg7[%c0_25, %c0_26] : memref<32x1xf32, #tpu.memory_space<vmem>>, vector<32x1xf32>
      %42 = arith.subf %40, %41 : vector<32x1xf32>
      %c32_i32 = arith.constant 32 : i32
      %43 = arith.muli %arg0, %c32_i32 : i32
      %44 = tpu.iota {dimensions = array<i32: 0>} : vector<32x1xi32>
      %45 = vector.broadcast %43 : i32 to vector<32x1xi32>
      %46 = arith.addi %45, %44 : vector<32x1xi32>
      %c80_i32 = arith.constant 80 : i32
      %47 = vector.broadcast %c80_i32 : i32 to vector<32x1xi32>
      %48 = arith.cmpi slt, %46, %47 : vector<32x1xi32>
      %cst_27 = arith.constant 0.000000e+00 : f32
      %49 = vector.broadcast %cst_27 : f32 to vector<32x1xf32>
      %50 = arith.select %48, %42, %49 : vector<32x1xi1>, vector<32x1xf32>
      %51 = vector.shape_cast %50 : vector<32x1xf32> to vector<1x32x1xf32>
      %cst_28 = arith.constant dense<0.000000e+00> : vector<1xf32>
      %52 = vector.multi_reduction <add>, %51, %cst_28 [1, 2] : vector<1x32x1xf32> to vector<1xf32>
      %53 = vector.shape_cast %52 : vector<1xf32> to vector<1x1x1xf32>
      %54 = vector.extract %53[0, 0, 0] : f32 from vector<1x1x1xf32>
      %55 = vector.broadcast %54 : f32 to vector<1x1x1xf32>
      %c0_29 = arith.constant 0 : index
      %c0_30 = arith.constant 0 : index
      %c0_31 = arith.constant 0 : index
      %56 = vector.load %arg4[%c0_29, %c0_30, %c0_31] : memref<1x1x1xf32, #tpu.memory_space<vmem>>, vector<1x1x1xf32>
      tpu.vector_store %arg4[%c0_29, %c0_30, %c0_31], %55 {strides = array<i32>} : memref<1x1x1xf32, #tpu.memory_space<vmem>>, vector<1x1x1xf32>,
    } else {
    }
    return
  }
  func.func @transform_0(%arg0: i32, %arg1: i32) -> (i32, i32) {
    %c0_i32 = arith.constant 0 : i32
    return %arg0, %arg1 : i32, i32
  }
  func.func @transform_1(%arg0: i32, %arg1: i32) -> (i32, i32) {
    %c0_i32 = arith.constant 0 : i32
    %c0_i32_0 = arith.constant 0 : i32
    return %arg0, %c0_i32 : i32, i32
  }
  func.func @transform_2(%arg0: i32, %arg1: i32) -> (i32, i32, i32) {
    %c0_i32 = arith.constant 0 : i32
    %c0_i32_0 = arith.constant 0 : i32
    %c0_i32_1 = arith.constant 0 : i32
    return %arg0, %c0_i32, %c0_i32_0 : i32, i32, i32
  }
}

</mosaic_0001>

<llo_original>
// kernel: cls_loss.1
$region0: #{cls_loss.1}
  #allocation0 [shape = 'u32[]', space=smem, size = 0x4, offset = 0x4, fixed_abs, tag = 'smem constant byte address 0x4 - core index']
  #allocation1 [shape = 'u32[72,128]{1,0:T(1,128)}', space=vmem, size = 0x9000, scoped, tag = 'internal scratch']
  #allocation2 [shape = 'f32[32,1]{1,0:T(8,128)}', space=vmem, size = 0x4000, scoped, tag = 'scratch operand']
  #allocation3 [shape = 'f32[32,1]{1,0:T(8,128)}', space=vmem, size = 0x4000, scoped, tag = 'scratch operand']
  #allocation4 [shape = 'f32[32,1]{1,0:T(8,128)}', space=vmem, size = 0x4000, scoped, tag = 'scratch operand']
  %s0 = inlined_call_operand.hbm [shape: f32[80,384], index: 0, kind: input, shape index: {}]
  %s1 = inlined_call_operand.vmem [shape: s32[80,1], index: 1, kind: input, shape index: {}]
  %s2 = inlined_call_operand.vmem [shape: f32[3,1,1], index: 2, kind: output, shape index: {}]
  %s3 = sld [smem:[#allocation0]]
  $region53: #{cls_loss.1} parent=0
    _
  %s5 = ssub.s32 1, %s3
  %s6 = scalar_select 0, %s5, %s3
  $region1: #{cls_loss.1} parent=0
    #allocation5 [shape = 'u8[98304]{0}', space=vmem, size = 0x18000, scoped, tag = 'input window, operand 0']
    #allocation6 [shape = 's32[2]{0}', space=sflag, size = 0x8, scoped, tag = 'scoped memory for cls_loss.1']
    %7 = vsyncpa [#allocation6], 0
    %s8 = scalar_lea.sflag [#allocation6], 1
    %9 = vsyncpa %s8, 0
    loop: start=0, step=1, limit=5
    $region2: #{cls_loss.1} parent=1 // loop_pre_header
      _
    $region3: #{cls_loss.1} parent=1 // loop_header
      %s11 = sphi 0, %s15
      %p12 = scmp.ge.s32.totalorder %s11, 5
      %s18 = sphi 0, %s30
      %s19 = sphi 0, %s26
      %s20 = sphi 0, %s18
      %s21 = sphi 0, %s19
      %s22 = sphi 0, %s20
      %s23 = sphi 0, %s21
      %s35 = sphi 0, %s37
      %s38 = sphi 0, %s35
      %s39 = sphi 0, %s38
      %s55 = sphi 0, %s39
      %s61 = sphi 0, %s63
      %s64 = sphi 0, %s61
      %s65 = sphi 0, %s64
      %s81 = sphi 0, %s65
      %s87 = sphi 0, %s89
      %s90 = sphi 0, %s87
      %s91 = sphi 0, %s90
      %s107 = sphi 0, %s91
    $region4: #{cls_loss.1} parent=1 // loop_header_branch
      %14 = sbr.rel (%p12) target = $region8
    $region5: #{cls_loss.1} parent=1 // loop_body
      %s16 = ssub.s32 %s11, 1
      %s17 = ssub.s32 %s11, 2
      %s24 = sadd.s32 1, %s19
      %p25 = scmp.ge.s32.totalorder %s24, 1
      %s26 = scalar_select %p25, 0, %s24
      %s27 = sadd.s32 1, %s18
      %s28 = scalar_select %p25, %s27, %s18
      %p29 = scmp.ge.s32.totalorder %s28, 3
      %s30 = scalar_select %p29, 0, %s28
      %s31 = ssub.s32 %s18, %s30
      %s32 = ssub.s32 %s19, %s26
      %s33 = sor.u32 %s31, %s32
      %p34 = scmp.eq.s32.totalorder %s33, 0
      %s36 = sadd.s32 %s35, 1
      %s37 = scalar_select %p34, %s35, %s36
      %p40 = pneg %p34
      %p41 = scmp.eq.s32.totalorder %s11, 2
      %p42 = por %p40, %p41
      %p43 = scmp.ne.s32.totalorder %s35, %s38
      %p44 = scmp.eq.s32.totalorder %s11, 0
      %p45 = por %p43, %p44
      %p46 = scmp.ne.s32.totalorder %s35, %s38
      %p47 = scmp.eq.s32.totalorder %s16, 2
      %p48 = por %p46, %p47
      %p49 = scmp.ne.s32.totalorder %s38, %s39
      %p50 = scmp.eq.s32.totalorder %s16, 0
      %p51 = por %p49, %p50
      %p52 = scmp.ne.s32.totalorder %s38, %s39
      %p53 = scmp.eq.s32.totalorder %s17, 2
      %p54 = por %p52, %p53
      %p56 = scmp.ne.s32.totalorder %s39, %s55
      %p57 = scmp.eq.s32.totalorder %s17, 0
      %p58 = por %p56, %p57
      %s59 = ssub.s32 %s18, %s30
      %p60 = scmp.eq.s32.totalorder %s59, 0
      %s62 = sadd.s32 %s61, 1
      %s63 = scalar_select %p60, %s61, %s62
      %p66 = pneg %p60
      %p67 = scmp.eq.s32.totalorder %s11, 2
      %p68 = por %p66, %p67
      %p69 = scmp.ne.s32.totalorder %s61, %s64
      %p70 = scmp.eq.s32.totalorder %s11, 0
      %p71 = por %p69, %p70
      %p72 = scmp.ne.s32.totalorder %s61, %s64
      %p73 = scmp.eq.s32.totalorder %s16, 2
      %p74 = por %p72, %p73
      %p75 = scmp.ne.s32.totalorder %s64, %s65
      %p76 = scmp.eq.s32.totalorder %s16, 0
      %p77 = por %p75, %p76
      %p78 = scmp.ne.s32.totalorder %s64, %s65
      %p79 = scmp.eq.s32.totalorder %s17, 2
      %p80 = por %p78, %p79
      %p82 = scmp.ne.s32.totalorder %s65, %s81
      %p83 = scmp.eq.s32.totalorder %s17, 0
      %p84 = por %p82, %p83
      %s85 = ssub.s32 %s18, %s30
      %p86 = scmp.eq.s32.totalorder %s85, 0
      %s88 = sadd.s32 %s87, 1
      %s89 = scalar_select %p86, %s87, %s88
      %p92 = pneg %p86
      %p93 = scmp.eq.s32.totalorder %s11, 2
      %p94 = por %p92, %p93
      %p95 = scmp.ne.s32.totalorder %s87, %s90
      %p96 = scmp.eq.s32.totalorder %s11, 0
      %p97 = por %p95, %p96
      %p98 = scmp.ne.s32.totalorder %s87, %s90
      %p99 = scmp.eq.s32.totalorder %s16, 2
      %p100 = por %p98, %p99
      %p101 = scmp.ne.s32.totalorder %s90, %s91
      %p102 = scmp.eq.s32.totalorder %s16, 0
      %p103 = por %p101, %p102
      %p104 = scmp.ne.s32.totalorder %s90, %s91
      %p105 = scmp.eq.s32.totalorder %s17, 2
      %p106 = por %p104, %p105
      %p108 = scmp.ne.s32.totalorder %s91, %s107
      %p109 = scmp.eq.s32.totalorder %s17, 0
      %p110 = por %p108, %p109
      %p111 = scmp.le.s32.totalorder 1, %s11
      %p112 = scmp.lt.s32.totalorder %s11, 4
      %p113 = pnand %p111, %p112
      %p114 = pneg %p113
      // Predicated region
      $region9: #{cls_loss.1} parent=5 // pred_check
        _
      $region10: #{cls_loss.1} parent=5 // pred_check_branch
        %116 = sbr.rel (%p113) target = $region12
      $region11: #{cls_loss.1} parent=5 // pred_region
        %s117 = ssub.s32 %s11, 1
      $region12: #{cls_loss.1} parent=5 // pred_fallthru
        _
      %p118 = scmp.lt.s32.totalorder %s11, 3
      // Predicated region
      $region13: #{cls_loss.1} parent=5 // pred_check
        %p119 = pneg %p118
      $region14: #{cls_loss.1} parent=5 // pred_check_branch
        %121 = sbr.rel (%p119) target = $region16
      $region15: #{cls_loss.1} parent=5 // pred_region
        // Predicated region
        $region17: #{cls_loss.1} parent=15 // pred_check
          %p122 = pneg %p45
        $region18: #{cls_loss.1} parent=15 // pred_check_branch
          %124 = sbr.rel (%p122) target = $region20
        $region19: #{cls_loss.1} parent=15 // pred_region
          %s125 = sand.u32 %s35, 1
          %s126 = scalar_lea.sflag [#allocation6], %s125
          %s127 = sand.u32 %s35, 1
          %s128 = smul.addr %s127, 96
          %s129 = scalar_lea.vmem [#allocation5], %s128
          %s130 = smul.u32 4, %s18
          %s131 = smul.u32 3, %s19
          %s132 = ssub.s32 10, %s130
          %p133 = scmp.lt.s32.totalorder %s132, 4
          %s134 = scalar_select %p133, %s132, 4
          %s135 = smul.u32 8, %s134
          %s136 = smul.u32 %s135, 3
          %s137 = ssub.s32 96, %s136
          %s138 = sshll.u32 %s137, 4
          %139 = vsyncadd %s126, %s138
          %p140 = scmp.ne.s32.totalorder 0, %s136
          %s141 = smul.addr %s130, 3
          %s142 = sadd.s32 %s131, %s141
          %s143 = smul.addr %s142, 8
          %s144 = scalar_lea.hbm %s0, %s143
          %s145 = smul.u32 24, %s134
          %s146 = sshll.u32 %s144, 4
          %s147 = int_to_ptr.hbm [resolvable:$true] %s146
          %s148 = sshll.u32 %s129, 4
          %s149 = int_to_ptr.vmem [resolvable:$true] %s148
          %s150 = sshll.u32 %s145, 4
          %154 = dma.hbm_to_vmem [thread:$0]  (%p140), %s147, %s150, %s149, %s126, 384, 384, 24
        $region20: #{cls_loss.1} parent=15 // pred_fallthru
          _
        // Predicated region
        $region21: #{cls_loss.1} parent=15 // pred_check
          %p155 = pneg %p71
        $region22: #{cls_loss.1} parent=15 // pred_check_branch
          %157 = sbr.rel (%p155) target = $region24
        $region23: #{cls_loss.1} parent=15 // pred_region
          %s158 = smul.u32 4, %s18
          %s159 = ssub.s32 10, %s158
          %p160 = scmp.lt.s32.totalorder %s159, 4
          %s161 = scalar_select %p160, %s159, 4
          %s162 = smul.u32 8, %s161
          %p163 = scmp.lt.s32.totalorder %s158, 9
          %s164 = scalar_select %p163, %s158, 9
          %s165 = smul.addr %s164, 8
          %s166 = scalar_lea.vmem %s1, %s165
          %s167 = smul.u32 4, %s18
          %s168 = ssub.s32 10, %s167
          %p169 = scmp.lt.s32.totalorder %s168, 4
          %s170 = scalar_select %p169, %s168, 4
          %s171 = smul.u32 8, %s170
        $region24: #{cls_loss.1} parent=15 // pred_fallthru
          _
      $region16: #{cls_loss.1} parent=5 // pred_fallthru
        _
      %p172 = scmp.le.s32.totalorder 1, %s11
      %p173 = scmp.lt.s32.totalorder %s11, 4
      %p174 = pnand %p172, %p173
      %p175 = pneg %p174
      // Predicated region
      $region25: #{cls_loss.1} parent=5 // pred_check
        _
      $region26: #{cls_loss.1} parent=5 // pred_check_branch
        %177 = sbr.rel (%p174) target = $region28
      $region27: #{cls_loss.1} parent=5 // pred_region
        %s178 = ssub.s32 %s11, 1
        %s179 = sand.u32 %s38, 1
        %s180 = scalar_lea.sflag [#allocation6], %s179
        %s181 = sand.u32 %s38, 1
        %s182 = smul.addr %s181, 96
        %s183 = scalar_lea.vmem [#allocation5], %s182
        // Predicated region
        $region29: #{cls_loss.1} parent=27 // pred_check
          %p184 = pneg %p51
        $region30: #{cls_loss.1} parent=27 // pred_check_branch
          %186 = sbr.rel (%p184) target = $region32
        $region31: #{cls_loss.1} parent=27 // pred_region
          %188 = dma.done %s180, 1536
        $region32: #{cls_loss.1} parent=27 // pred_fallthru
          _
        %s189 = sand.u32 %s38, 1
        %s190 = scalar_lea.sflag [#allocation6], %s189
        %s191 = sand.u32 %s38, 1
        %s192 = smul.addr %s191, 96
        %s193 = scalar_lea.vmem [#allocation5], %s192
        %p194 = pneg %p51
        %p195 = pneg %p48
        %s196 = smul.u32 4, %s20
        %s197 = ssub.s32 10, %s196
        %p198 = scmp.lt.s32.totalorder %s197, 4
        %s199 = scalar_select %p198, %s197, 4
        %s200 = smul.u32 8, %s199
        %p201 = scmp.lt.s32.totalorder %s196, 9
        %s202 = scalar_select %p201, %s196, 9
        %s203 = smul.addr %s202, 8
        %s204 = scalar_lea.vmem %s1, %s203
        %p205 = pneg %p77
        %p206 = pneg %p74
        %p207 = pneg %p103
        %p208 = pneg %p100
        %p209 = scmp.lt.s32.totalorder %s20, 2
        %s210 = scalar_select %p209, %s20, 2
        %s211 = scalar_lea.vmem %s2, %s210
        %s212 = smul.u32 4, %s20
        %s213 = smul.u32 3, %s21
        %s214 = ssub.s32 10, %s212
        %p215 = scmp.lt.s32.totalorder %s214, 4
        %s216 = scalar_select %p215, %s214, 4
        %s217 = smul.u32 8, %s216
        %s218 = smul.u32 %s217, 3
        %s219 = smul.u32 4, %s20
        %s220 = ssub.s32 10, %s219
        %p221 = scmp.lt.s32.totalorder %s220, 4
        %s222 = scalar_select %p221, %s220, 4
        %s223 = smul.u32 8, %s222
        %p224 = scmp.lt.s32.totalorder %s219, 9
        %s225 = scalar_select %p224, %s219, 9
        %s226 = smul.addr %s225, 8
        %s227 = scalar_lea.vmem %s1, %s226
        %s228 = smul.u32 4, %s20
        %s229 = ssub.s32 10, %s228
        %p230 = scmp.lt.s32.totalorder %s229, 4
        %s231 = scalar_select %p230, %s229, 4
        %s232 = smul.u32 8, %s231
        %p233 = scmp.lt.s32.totalorder %s20, 2
        %s234 = scalar_select %p233, %s20, 2
        %s235 = scalar_lea.vmem %s2, %s234
        %p236 = scmp.eq.s32.totalorder %s21, 0
        // Predicated region
        $region33: #{cls_loss.1} parent=27 // pred_check
          %p237 = pneg %p236
        $region34: #{cls_loss.1} parent=27 // pred_check_branch
          %239 = sbr.rel (%p237) target = $region36
        $region35: #{cls_loss.1} parent=27 // pred_region
          %vm240 = vcmask 7168
          %241 = vst.msk [vmem:[#allocation2] sm:$0xff] %vm240, -inf
          %242 = vst.msk [vmem:[#allocation2 + $0x8] sm:$0xff] %vm240, -inf
          %243 = vst.msk [vmem:[#allocation2 + $0x10] sm:$0xff] %vm240, -inf
          %244 = vst.msk [vmem:[#allocation2 + $0x18] sm:$0xff] %vm240, -inf
          %245 = vst.msk [vmem:[#allocation3] sm:$0xff] %vm240, 0.0
          %246 = vst.msk [vmem:[#allocation3 + $0x8] sm:$0xff] %vm240, 0.0
          %247 = vst.msk [vmem:[#allocation3 + $0x10] sm:$0xff] %vm240, 0.0
          %248 = vst.msk [vmem:[#allocation3 + $0x18] sm:$0xff] %vm240, 0.0
          %249 = vst.msk [vmem:[#allocation4] sm:$0xff] %vm240, 0.0
          %250 = vst.msk [vmem:[#allocation4 + $0x8] sm:$0xff] %vm240, 0.0
          %251 = vst.msk [vmem:[#allocation4 + $0x10] sm:$0xff] %vm240, 0.0
          %252 = vst.msk [vmem:[#allocation4 + $0x18] sm:$0xff] %vm240, 0.0
        $region36: #{cls_loss.1} parent=27 // pred_fallthru
          _
        %v253 = vld [vmem:[%s183] sm:$0xff]
        %v254 = vld [vmem:[%s183 + $0x8] sm:$0xff]
        %v255 = vld [vmem:[%s183 + $0x10] sm:$0xff]
        %v256 = vld [vmem:[%s183 + $0x18] sm:$0xff]
        %v257 = vld [vmem:[%s183 + $0x20] sm:$0xff]
        %v258 = vld [vmem:[%s183 + $0x28] sm:$0xff]
        %v259 = vld [vmem:[%s183 + $0x30] sm:$0xff]
        %v260 = vld [vmem:[%s183 + $0x38] sm:$0xff]
        %v261 = vld [vmem:[%s183 + $0x40] sm:$0xff]
        %v262 = vld [vmem:[%s183 + $0x48] sm:$0xff]
        %v263 = vld [vmem:[%s183 + $0x50] sm:$0xff]
        %v264 = vld [vmem:[%s183 + $0x58] sm:$0xff]
        %v265 = vld [vmem:[%s227] sm:$0xff]
        %v266 = vld [vmem:[%s227 + $0x8] sm:$0xff]
        %v267 = vld [vmem:[%s227 + $0x10] sm:$0xff]
        %v268 = vld [vmem:[%s227 + $0x18] sm:$0xff]
        %s269 = smul.u32 %s21, 384
        %v270 = vlaneseq
        %v271 = vand.u32 %v270, 127
        %v272 = vadd.s32 %v271, 128
        %v273 = vadd.s32 %v271, 256
        %v274 = vstv %s269
        %v275 = vadd.s32 %v274, %v271
        %v276 = vadd.s32 %v274, %v272
        %v277 = vadd.s32 %v274, %v273
        %v278 = vld [vmem:[#allocation2] sm:$0xff]
        %v279 = vld [vmem:[#allocation2 + $0x8] sm:$0xff]
        %v280 = vld [vmem:[#allocation2 + $0x10] sm:$0xff]
        %v281 = vld [vmem:[#allocation2 + $0x18] sm:$0xff]
        %v282 = vmax.f32 %v253, %v254
        %v283 = vmax.f32 %v282, %v255
        %284 = vmax.xlane.f32.xlu0 %v283
        %v285 = vpop.xlane.xlu0 %284
        %v286 = vmax.f32 %v256, %v257
        %v287 = vmax.f32 %v286, %v258
        %288 = vmax.xlane.f32.xlu0 %v287
        %v289 = vpop.xlane.xlu0 %288
        %v290 = vmax.f32 %v259, %v260
        %v291 = vmax.f32 %v290, %v261
        %292 = vmax.xlane.f32.xlu0 %v291
        %v293 = vpop.xlane.xlu0 %292
        %v294 = vmax.f32 %v262, %v263
        %v295 = vmax.f32 %v294, %v264
        %296 = vmax.xlane.f32.xlu0 %v295
        %v297 = vpop.xlane.xlu0 %296
        %v298 = vmax.f32 %v278, %v285
        %v299 = vmax.f32 %v279, %v289
        %v300 = vmax.f32 %v280, %v293
        %v301 = vmax.f32 %v281, %v297
        %303 = vset.pattern.permute.xlu0 0
        %304 = vperm.xlu0 %303, %v298
        %v305 = vpop.permute.xlu0 %304
        %308 = vset.pattern.permute.xlu0 0
        %309 = vperm.xlu0 %308, %v299
        %v310 = vpop.permute.xlu0 %309
        %313 = vset.pattern.permute.xlu0 0
        %314 = vperm.xlu0 %313, %v300
        %v315 = vpop.permute.xlu0 %314
        %318 = vset.pattern.permute.xlu0 0
        %319 = vperm.xlu0 %318, %v301
        %v320 = vpop.permute.xlu0 %319
        %v322 = vsub.f32 %v253, %v305
        %v323 = vsub.f32 %v254, %v305
        %v324 = vsub.f32 %v255, %v305
        %v325 = vsub.f32 %v256, %v310
        %v326 = vsub.f32 %v257, %v310
        %v327 = vsub.f32 %v258, %v310
        %v328 = vsub.f32 %v259, %v315
        %v329 = vsub.f32 %v260, %v315
        %v330 = vsub.f32 %v261, %v315
        %v331 = vsub.f32 %v262, %v320
        %v332 = vsub.f32 %v263, %v320
        %v333 = vsub.f32 %v264, %v320
        %v334 = vmul.f32 %v322, 1.442695
        %v335 = vpow.pop %v334
        %v336 = vmul.f32 %v323, 1.442695
        %v337 = vpow.pop %v336
        %v338 = vmul.f32 %v324, 1.442695
        %v339 = vpow.pop %v338
        %v340 = vmul.f32 %v325, 1.442695
        %v341 = vpow.pop %v340
        %v342 = vmul.f32 %v326, 1.442695
        %v343 = vpow.pop %v342
        %v344 = vmul.f32 %v327, 1.442695
        %v345 = vpow.pop %v344
        %v346 = vmul.f32 %v328, 1.442695
        %v347 = vpow.pop %v346
        %v348 = vmul.f32 %v329, 1.442695
        %v349 = vpow.pop %v348
        %v350 = vmul.f32 %v330, 1.442695
        %v351 = vpow.pop %v350
        %v352 = vmul.f32 %v331, 1.442695
        %v353 = vpow.pop %v352
        %v354 = vmul.f32 %v332, 1.442695
        %v355 = vpow.pop %v354
        %v356 = vmul.f32 %v333, 1.442695
        %v357 = vpow.pop %v356
        %v358 = vld [vmem:[#allocation3] sm:$0xff]
        %v359 = vld [vmem:[#allocation3 + $0x8] sm:$0xff]
        %v360 = vld [vmem:[#allocation3 + $0x10] sm:$0xff]
        %v361 = vld [vmem:[#allocation3 + $0x18] sm:$0xff]
        %v362 = vsub.f32 %v278, %v298
        %v363 = vsub.f32 %v279, %v299
        %v364 = vsub.f32 %v280, %v300
        %v365 = vsub.f32 %v281, %v301
        %v366 = vmul.f32 %v362, 1.442695
        %v367 = vpow.pop %v366
        %v368 = vmul.f32 %v363, 1.442695
        %v369 = vpow.pop %v368
        %v370 = vmul.f32 %v364, 1.442695
        %v371 = vpow.pop %v370
        %v372 = vmul.f32 %v365, 1.442695
        %v373 = vpow.pop %v372
        %v374 = vmul.f32 %v358, %v367
        %v375 = vmul.f32 %v359, %v369
        %v376 = vmul.f32 %v360, %v371
        %v377 = vmul.f32 %v361, %v373
        %v378 = vadd.f32 %v335, %v337
        %v379 = vadd.f32 %v378, %v339
        %380 = vadd.xlane.f32.xlu0 %v379
        %v381 = vpop.xlane.xlu0 %380
        %v382 = vadd.f32 %v341, %v343
        %v383 = vadd.f32 %v382, %v345
        %384 = vadd.xlane.f32.xlu0 %v383
        %v385 = vpop.xlane.xlu0 %384
        %v386 = vadd.f32 %v347, %v349
        %v387 = vadd.f32 %v386, %v351
        %388 = vadd.xlane.f32.xlu0 %v387
        %v389 = vpop.xlane.xlu0 %388
        %v390 = vadd.f32 %v353, %v355
        %v391 = vadd.f32 %v390, %v357
        %392 = vadd.xlane.f32.xlu0 %v391
        %v393 = vpop.xlane.xlu0 %392
        %v394 = vadd.f32 %v374, %v381
        %v395 = vadd.f32 %v375, %v385
        %v396 = vadd.f32 %v376, %v389
        %v397 = vadd.f32 %v377, %v393
        %vm398 = vcmask 7168
        %399 = vst.msk [vmem:[#allocation3] sm:$0xff] %vm398, %v394
        %400 = vst.msk [vmem:[#allocation3 + $0x8] sm:$0xff] %vm398, %v395
        %401 = vst.msk [vmem:[#allocation3 + $0x10] sm:$0xff] %vm398, %v396
        %402 = vst.msk [vmem:[#allocation3 + $0x18] sm:$0xff] %vm398, %v397
        %403 = vst.msk [vmem:[#allocation2] sm:$0xff] %vm398, %v298
        %404 = vst.msk [vmem:[#allocation2 + $0x8] sm:$0xff] %vm398, %v299
        %405 = vst.msk [vmem:[#allocation2 + $0x10] sm:$0xff] %vm398, %v300
        %406 = vst.msk [vmem:[#allocation2 + $0x18] sm:$0xff] %vm398, %v301
        %407 = vset.pattern.permute.xlu0 0
        %408 = vperm.xlu0 %407, %v265
        %v409 = vpop.permute.xlu0 %408
        %410 = vset.pattern.permute.xlu0 0
        %411 = vperm.xlu0 %410, %v266
        %v412 = vpop.permute.xlu0 %411
        %413 = vset.pattern.permute.xlu0 0
        %414 = vperm.xlu0 %413, %v267
        %v415 = vpop.permute.xlu0 %414
        %416 = vset.pattern.permute.xlu0 0
        %417 = vperm.xlu0 %416, %v268
        %v418 = vpop.permute.xlu0 %417
        %vm419 = vcmp.eq.s32.totalorder %v275, %v409
        %vm420 = vcmp.eq.s32.totalorder %v276, %v409
        %vm421 = vcmp.eq.s32.totalorder %v277, %v409
        %vm422 = vcmp.eq.s32.totalorder %v275, %v412
        %vm423 = vcmp.eq.s32.totalorder %v276, %v412
        %vm424 = vcmp.eq.s32.totalorder %v277, %v412
        %vm425 = vcmp.eq.s32.totalorder %v275, %v415
        %vm426 = vcmp.eq.s32.totalorder %v276, %v415
        %vm427 = vcmp.eq.s32.totalorder %v277, %v415
        %vm428 = vcmp.eq.s32.totalorder %v275, %v418
        %vm429 = vcmp.eq.s32.totalorder %v276, %v418
        %vm430 = vcmp.eq.s32.totalorder %v277, %v418
        %v431 = vld [vmem:[#allocation4] sm:$0xff]
        %v432 = vld [vmem:[#allocation4 + $0x8] sm:$0xff]
        %v433 = vld [vmem:[#allocation4 + $0x10] sm:$0xff]
        %v434 = vld [vmem:[#allocation4 + $0x18] sm:$0xff]
        %v435 = vsel %vm419, %v253, 0.0
        %v436 = vsel %vm420, %v254, 0.0
        %v437 = vsel %vm421, %v255, 0.0
        %v438 = vsel %vm422, %v256, 0.0
        %v439 = vsel %vm423, %v257, 0.0
        %v440 = vsel %vm424, %v258, 0.0
        %v441 = vsel %vm425, %v259, 0.0
        %v442 = vsel %vm426, %v260, 0.0
        %v443 = vsel %vm427, %v261, 0.0
        %v444 = vsel %vm428, %v262, 0.0
        %v445 = vsel %vm429, %v263, 0.0
        %v446 = vsel %vm430, %v264, 0.0
        %v447 = vadd.f32 %v435, %v436
        %v448 = vadd.f32 %v447, %v437
        %449 = vadd.xlane.f32.xlu0 %v448
        %v450 = vpop.xlane.xlu0 %449
        %v451 = vadd.f32 %v438, %v439
        %v452 = vadd.f32 %v451, %v440
        %453 = vadd.xlane.f32.xlu0 %v452
        %v454 = vpop.xlane.xlu0 %453
        %v455 = vadd.f32 %v441, %v442
        %v456 = vadd.f32 %v455, %v443
        %457 = vadd.xlane.f32.xlu0 %v456
        %v458 = vpop.xlane.xlu0 %457
        %v459 = vadd.f32 %v444, %v445
        %v460 = vadd.f32 %v459, %v446
        %461 = vadd.xlane.f32.xlu0 %v460
        %v462 = vpop.xlane.xlu0 %461
        %v463 = vadd.f32 %v431, %v450
        %v464 = vadd.f32 %v432, %v454
        %v465 = vadd.f32 %v433, %v458
        %v466 = vadd.f32 %v434, %v462
        %467 = vst.msk [vmem:[#allocation4] sm:$0xff] %vm398, %v463
        %468 = vst.msk [vmem:[#allocation4 + $0x8] sm:$0xff] %vm398, %v464
        %469 = vst.msk [vmem:[#allocation4 + $0x10] sm:$0xff] %vm398, %v465
        %470 = vst.msk [vmem:[#allocation4 + $0x18] sm:$0xff] %vm398, %v466
        // Predicated region
        $region37: #{cls_loss.1} parent=27 // pred_check
          %p471 = pneg %p236
        $region38: #{cls_loss.1} parent=27 // pred_check_branch
          %473 = sbr.rel (%p471) target = $region40
        $region39: #{cls_loss.1} parent=27 // pred_region
          %v474 = vld [vmem:[#allocation2] sm:$0xff]
          %v475 = vld [vmem:[#allocation2 + $0x8] sm:$0xff]
          %v476 = vld [vmem:[#allocation2 + $0x10] sm:$0xff]
          %v477 = vld [vmem:[#allocation2 + $0x18] sm:$0xff]
          %v478 = vld [vmem:[#allocation3] sm:$0xff]
          %v479 = vld [vmem:[#allocation3 + $0x8] sm:$0xff]
          %v480 = vld [vmem:[#allocation3 + $0x10] sm:$0xff]
          %v481 = vld [vmem:[#allocation3 + $0x18] sm:$0xff]
          %v482 = vlog2.pop %v478
          %v483 = vmul.f32 %v482, 0.6931472
          %v484 = vlog2.pop %v479
          %v485 = vmul.f32 %v484, 0.6931472
          %v486 = vlog2.pop %v480
          %v487 = vmul.f32 %v486, 0.6931472
          %v488 = vlog2.pop %v481
          %v489 = vmul.f32 %v488, 0.6931472
          %v490 = vadd.f32 %v474, %v483
          %v491 = vadd.f32 %v475, %v485
          %v492 = vadd.f32 %v476, %v487
          %v493 = vadd.f32 %v477, %v489
          %v494 = vld [vmem:[#allocation4] sm:$0xff]
          %v495 = vld [vmem:[#allocation4 + $0x8] sm:$0xff]
          %v496 = vld [vmem:[#allocation4 + $0x10] sm:$0xff]
          %v497 = vld [vmem:[#allocation4 + $0x18] sm:$0xff]
          %v498 = vsub.f32 %v490, %v494
          %v499 = vsub.f32 %v491, %v495
          %v500 = vsub.f32 %v492, %v496
          %v501 = vsub.f32 %v493, %v497
          %s502 = smul.u32 %s20, 32
          %v503 = vlaneseq
          %v504 = vshrl.u32 %v503, 7
          %v505 = vadd.s32 %v504, 8
          %v506 = vadd.s32 %v504, 16
          %v507 = vadd.s32 %v504, 24
          %v508 = vstv %s502
          %v509 = vadd.s32 %v508, %v504
          %v510 = vadd.s32 %v508, %v505
          %v511 = vadd.s32 %v508, %v506
          %v512 = vadd.s32 %v508, %v507
          %vm513 = vcmp.lt.s32.totalorder %v509, 80
          %vm514 = vcmp.lt.s32.totalorder %v510, 80
          %vm515 = vcmp.lt.s32.totalorder %v511, 80
          %vm516 = vcmp.lt.s32.totalorder %v512, 80
          %v517 = vsel %vm513, %v498, 0.0
          %v518 = vsel %vm514, %v499, 0.0
          %v519 = vsel %vm515, %v500, 0.0
          %v520 = vsel %vm516, %v501, 0.0
          %v521 = vsel %vm398, %v517, 0.0
          %v522 = vsel %vm398, %v518, 0.0
          %v523 = vadd.f32 %v521, %v522
          %v524 = vsel %vm398, %v519, 0.0
          %v525 = vadd.f32 %v523, %v524
          %v526 = vsel %vm398, %v520, 0.0
          %v527 = vadd.f32 %v525, %v526
          %528 = vadd.xlane.f32.xlu0 %v527
          %v529 = vpop.xlane.xlu0 %528
          %v530 = vrot.slane %v529, 4
          %v531 = vadd.f32 %v529, %v530
          %v532 = vrot.slane %v531, 2
          %v533 = vadd.f32 %v531, %v532
          %v534 = vrot.slane %v533, 1
          %v535 = vadd.f32 %v533, %v534
          %s536 = vtos %v535
          %v537 = vstv %s536
          %vm538 = vcmask 0
          %539 = vst.msk [vmem:[%s235] sm:$0x1] %vm538, %v537
        $region40: #{cls_loss.1} parent=27 // pred_fallthru
          _
        %p540 = scmp.lt.s32.totalorder %s20, 2
        %s541 = scalar_select %p540, %s20, 2
        %s542 = scalar_lea.vmem %s2, %s541
        // Predicated region
        $region41: #{cls_loss.1} parent=27 // pred_check
          %p543 = pneg %p100
        $region42: #{cls_loss.1} parent=27 // pred_check_branch
          %545 = sbr.rel (%p543) target = $region44
        $region43: #{cls_loss.1} parent=27 // pred_region
          _
        $region44: #{cls_loss.1} parent=27 // pred_fallthru
          _
      $region28: #{cls_loss.1} parent=5 // pred_fallthru
        _
      %p546 = scmp.le.s32.totalorder 2, %s11
      // Predicated region
      $region45: #{cls_loss.1} parent=5 // pred_check
        %p547 = pneg %p546
      $region46: #{cls_loss.1} parent=5 // pred_check_branch
        %549 = sbr.rel (%p547) target = $region48
      $region47: #{cls_loss.1} parent=5 // pred_region
        %s550 = ssub.s32 %s11, 2
        // Predicated region
        $region49: #{cls_loss.1} parent=47 // pred_check
          %p551 = pneg %p106
        $region50: #{cls_loss.1} parent=47 // pred_check_branch
          %553 = sbr.rel (%p551) target = $region52
        $region51: #{cls_loss.1} parent=47 // pred_region
          %p554 = scmp.lt.s32.totalorder %s22, 2
          %s555 = scalar_select %p554, %s22, 2
          %s556 = scalar_lea.vmem %s2, %s555
        $region52: #{cls_loss.1} parent=47 // pred_fallthru
          _
      $region48: #{cls_loss.1} parent=5 // pred_fallthru
        _
    $region6: #{cls_loss.1} parent=1 // loop_footer
      %s15 = sadd.s32 1, %s11
    $region7: #{cls_loss.1} parent=1 // loop_footer_branch
      %10 = sbr.rel target = $region3
    $region8: #{cls_loss.1} parent=1 // loop_exit
      _
    %557 = vsyncpa [#allocation6], 1
    %s558 = scalar_lea.sflag [#allocation6], 1
    %559 = vsyncpa %s558, 1

</llo_original>
